<compile_context>
chip_gen: v7x
topology: tpu7x:2x2x1
jax: 0.10.0
libtpu: 0.0.40
codegen_flags: <defaults>
</compile_context>

<pallas_src>
import jax
import jax.numpy as jnp
from jax.experimental import pallas as pl
from jax.experimental.pallas import tpu as pltpu

# Per-pipeline-buffer byte budget for the VMEM copy path. 2 MiB/buffer puts
# measured copy-class kernels near ~85% of HBM roofline; with input + output
# each double-buffered the peak is ~4x this (= 8 MiB), comfortably under the
# scoped-VMEM defaults on v5e (16 MiB), v6e and v7x (32 MiB).
_BUDGET_BYTES = 2 * 1024 * 1024

# Wide lane-dense slab candidates (all multiples of 128). Wider last dims give
# unmasked `vst`, longer contiguous DMA runs and fewer grid steps.
_LANE_CANDIDATES = (1024, 512, 256, 128)


def _identity_kernel(x_ref, o_ref):
    # Pure elementwise pass-through of the current VMEM tile.
    o_ref[...] = x_ref[...]


def _dma_copy_kernel(x_ref, o_ref, sem):
    # Single HBM->HBM DMA of the whole array: no VMEM round trip.
    cp = pltpu.make_async_copy(x_ref, o_ref, sem)
    cp.start()
    cp.wait()


def _sublane_min(dtype) -> int:
    # Native packed vreg sublane tile: 8 rows for 4-byte dtypes, 16 for 2-byte
    # (bf16), 32 for 1-byte (int8/fp8).
    itemsize = jnp.dtype(dtype).itemsize
    return max(8, 32 // max(1, itemsize))


def _pick_block_rows(rows: int, cols: int, dtype) -> int:
    """Largest row tile within the byte budget, aligned to the sublane tile.

    If the budget-derived tile covers all rows, use the full row extent (a
    block dim equal to the full array dim is always legal). Otherwise the tile
    is a multiple of the dtype-aware sublane minimum and the grid uses
    pl.cdiv with a masked partial boundary tile.
    """
    sub = _sublane_min(dtype)
    itemsize = jnp.dtype(dtype).itemsize
    cand = _BUDGET_BYTES // max(1, cols * itemsize)
    cand = max(sub, (cand // sub) * sub)
    return rows if cand >= rows else cand


def pallas_identity(x: jax.Array) -> jax.Array:
    """Tiled, lane-dense identity copy through VMEM.

    Reshapes `x` to a 2D slab whose last dim is the widest of
    (1024, 512, 256, 128) that divides the element count; otherwise keeps the
    natural last dim (block last dim == full array dim satisfies the (8,128)
    rule). Tiles the row axis with a ~2 MiB/buffer budget and a cdiv grid so
    awkward row counts never collapse into a single whole-array block.
    """
    orig_shape = x.shape
    total = int(x.size)
    if total == 0:
        return x  # nothing to copy

    width = None
    for w in _LANE_CANDIDATES:
        if total % w == 0:
            width = w
            break

    if width is None:
        # Non-128-divisible element count: keep the natural trailing dim.
        cols = orig_shape[-1] if x.ndim >= 2 else total
        x2d = x.reshape(-1, cols)
    else:
        x2d = x.reshape(-1, width)

    rows, cols = x2d.shape
    block_rows = _pick_block_rows(rows, cols, x.dtype)
    grid = (pl.cdiv(rows, block_rows),)

    y2d = pl.pallas_call(
        _identity_kernel,
        out_shape=jax.ShapeDtypeStruct((rows, cols), x.dtype),
        grid=grid,
        in_specs=[pl.BlockSpec((block_rows, cols), lambda i: (i, 0))],
        out_specs=pl.BlockSpec((block_rows, cols), lambda i: (i, 0)),
        compiler_params=pltpu.CompilerParams(
            # Mem-bound copy: "parallel" is free to leave on (lets v7x shard
            # the grid across its 2 TCs) but the tile size is the real lever.
            dimension_semantics=("parallel",)
        ),
    )(x2d)
    return y2d.reshape(orig_shape)


def pallas_identity_dma(x: jax.Array) -> jax.Array:
    """Architectural-floor identity copy: direct HBM->HBM DMA, no VMEM staging."""
    return pl.pallas_call(
        _dma_copy_kernel,
        out_shape=jax.ShapeDtypeStruct(x.shape, x.dtype),
        in_specs=[pl.BlockSpec(memory_space=pl.ANY)],
        out_specs=pl.BlockSpec(memory_space=pl.ANY),
        scratch_shapes=[pltpu.SemaphoreType.DMA],
    )(x)


def fcnn_forward(x: jax.Array):
    """Faithful port of FCNN.forward: the body is `pass`, so it returns None.

    No kernel is launched here — launching one whose result is discarded would
    be pure waste (and would be DCE'd under jit anyway).
    """
    del x
    return None


if __name__ == "__main__":
    key = jax.random.PRNGKey(0)
    x = jax.random.normal(key, (2, 4, 16, 16), dtype=jnp.float32)

    # Lane-dense tiled VMEM copy path (total = 2048 -> slab (2, 1024)).
    y = pallas_identity(x)
    jax.block_until_ready(y)
    assert y.shape == x.shape and y.dtype == x.dtype
    assert bool(jnp.array_equal(y, x))

    # Architectural floor: direct HBM->HBM DMA copy.
    y_dma = pallas_identity_dma(x)
    jax.block_until_ready(y_dma)
    assert y_dma.shape == x.shape and y_dma.dtype == x.dtype
    assert bool(jnp.array_equal(y_dma, x))

    # Multi-step grid with a masked partial boundary tile:
    # (1024, 768) f32 -> slab (768, 1024), block_rows = 512, grid = cdiv = 2.
    x_big = jax.random.normal(jax.random.PRNGKey(1), (1024, 768), dtype=jnp.float32)
    y_big = pallas_identity(x_big)
    jax.block_until_ready(y_big)
    assert bool(jnp.array_equal(y_big, x_big))

    # Non-128-divisible fallback: natural last dim kept (block == full dims).
    x_odd = jax.random.normal(jax.random.PRNGKey(2), (24, 40, 7), dtype=jnp.float32)
    y_odd = pallas_identity(x_odd)
    jax.block_until_ready(y_odd)
    assert bool(jnp.array_equal(y_odd, x_odd))

    # Faithful forward semantics: empty forward body -> returns None.
    out = fcnn_forward(x)
    assert out is None

    print("KERNEL_OK")
</pallas_src>

<mosaic_0001>
module attributes {stable_mosaic.version = 11 : i64} {
  func.func @_identity_kernel(%arg0: i32, %arg1: memref<2x1024xf32, #tpu.memory_space<vmem>>, %arg2: memref<2x1024xf32, #tpu.memory_space<vmem>>) attributes {dimension_semantics = [#tpu.dimension_semantics<parallel>], iteration_bounds = array<i64: 1>, scalar_prefetch = 0 : i64, scratch_operands = 0 : i64, tpu.core_type = #tpu.core_type<tc>, window_params = [{transform_indices = @transform_0, window_bounds = array<i64: 2, 1024>}, {transform_indices = @transform_1, window_bounds = array<i64: 2, 1024>}]} {
    %c0 = arith.constant 0 : index
    %c0_0 = arith.constant 0 : index
    %0 = vector.load %arg1[%c0, %c0_0] : memref<2x1024xf32, #tpu.memory_space<vmem>>, vector<2x1024xf32>
    %c0_1 = arith.constant 0 : index
    %c0_2 = arith.constant 0 : index
    %1 = vector.load %arg2[%c0_1, %c0_2] : memref<2x1024xf32, #tpu.memory_space<vmem>>, vector<2x1024xf32>
    tpu.vector_store %arg2[%c0_1, %c0_2], %0 {strides = array<i32>} : memref<2x1024xf32, #tpu.memory_space<vmem>>, vector<2x1024xf32>,
    return
  }
  func.func @transform_0(%arg0: i32) -> (i32, i32) {
    %c0_i32 = arith.constant 0 : i32
    %c0_i32_0 = arith.constant 0 : i32
    return %arg0, %c0_i32 : i32, i32
  }
  func.func @transform_1(%arg0: i32) -> (i32, i32) {
    %c0_i32 = arith.constant 0 : i32
    %c0_i32_0 = arith.constant 0 : i32
    return %arg0, %c0_i32 : i32, i32
  }
}

</mosaic_0001>

<llo_original>
// kernel: tpu_custom_call.1
$region0: #{tpu_custom_call.1}
  #allocation0 [shape = 'u32[]', space=smem, size = 0x4, offset = 0x4, fixed_abs, tag = 'smem constant byte address 0x4 - core index']
  #allocation1 [shape = 'u32[144,128]{1,0:T(1,128)}', space=vmem, size = 0x12000, scoped, tag = 'internal scratch']
  %s0 = inlined_call_operand.hbm [shape: f32[2,1024], index: 0, kind: input, shape index: {}]
  %s1 = inlined_call_operand.hbm [shape: f32[2,1024], index: 1, kind: output, shape index: {}]
  %s2 = sld [smem:[#allocation0]]
  $region18: #{tpu_custom_call.1} parent=0
    _
  %s4 = ssub.s32 1, %s2
  %s5 = scalar_select 0, %s4, %s2
  $region1: #{tpu_custom_call.1} parent=0
    #allocation2 [shape = 'u8[8192]{0}', space=vmem, size = 0x2000, scoped, tag = 'input window, operand 0, single buffered']
    #allocation3 [shape = 's32[1]{0}', space=sflag, size = 0x4, scoped, tag = 'scoped memory for tpu_custom_call.1']
    #allocation4 [shape = 's32[1]{0}', space=sflag, size = 0x4, scoped, tag = 'scoped memory for tpu_custom_call.1']
    #allocation5 [shape = 'u8[8192]{0}', space=vmem, size = 0x2000, scoped, tag = 'output window, operand 0, single buffered']
    %6 = vsyncpa [#allocation3], 0
    %7 = vsyncpa [#allocation4], 0
    // Predicated region
    $region2: #{tpu_custom_call.1} parent=1 // pred_check
      _
    $region3: #{tpu_custom_call.1} parent=1 // pred_check_branch
      %9 = sbr.rel (0) target = $region5
    $region4: #{tpu_custom_call.1} parent=1 // pred_region
      %s11 = ssub.s32 256, 256
      %12 = vsyncadd [#allocation3], %s11
      %s14 = sshll.u32 [#allocation2], 4
      %s15 = int_to_ptr.vmem [resolvable:$true] %s14
      %17 = dma.hbm_to_vmem [thread:$0]  %s0, 256, %s15, [#allocation3]
    $region5: #{tpu_custom_call.1} parent=1 // pred_fallthru
      _
    // Predicated region
    $region6: #{tpu_custom_call.1} parent=1 // pred_check
      _
    $region7: #{tpu_custom_call.1} parent=1 // pred_check_branch
      %19 = sbr.rel (0) target = $region9
    $region8: #{tpu_custom_call.1} parent=1 // pred_region
      %20 = dma.done [#allocation3], 256
    $region9: #{tpu_custom_call.1} parent=1 // pred_fallthru
      _
    %v21 = vld [vmem:[#allocation2] sm:$0xff]
    %v22 = vld [vmem:[#allocation2 + $0x8] sm:$0xff]
    %23 = vst [vmem:[#allocation5] sm:$0xff] %v21
    %24 = vst [vmem:[#allocation5 + $0x8] sm:$0xff] %v22
    // Predicated region
    $region10: #{tpu_custom_call.1} parent=1 // pred_check
      _
    $region11: #{tpu_custom_call.1} parent=1 // pred_check_branch
      %26 = sbr.rel (0) target = $region13
    $region12: #{tpu_custom_call.1} parent=1 // pred_region
      %s28 = ssub.s32 256, 256
      %29 = vsyncadd [#allocation4], %s28
      %s31 = sshll.u32 [#allocation5], 4
      %s32 = int_to_ptr.vmem [resolvable:$true] %s31
      %34 = dma.vmem_to_hbm [thread:$0]  %s32, 256, %s1, [#allocation4]
    $region13: #{tpu_custom_call.1} parent=1 // pred_fallthru
      _
    // Predicated region
    $region14: #{tpu_custom_call.1} parent=1 // pred_check
      _
    $region15: #{tpu_custom_call.1} parent=1 // pred_check_branch
      %36 = sbr.rel (0) target = $region17
    $region16: #{tpu_custom_call.1} parent=1 // pred_region
      %37 = dma.done [#allocation4], 256
    $region17: #{tpu_custom_call.1} parent=1 // pred_fallthru
      _
    %38 = vsyncpa [#allocation3], 1
    %39 = vsyncpa [#allocation4], 1

</llo_original>
